<compile_context>
chip_gen: v7x
topology: tpu7x:2x2x1
jax: 0.10.0
libtpu: 0.0.40
codegen_flags: <defaults>
</compile_context>

<pallas_src>
import functools
import itertools

import jax
import jax.numpy as jnp
from jax.experimental import pallas as pl
from jax.experimental.pallas import tpu as pltpu

ACTIONS = [x for x in itertools.product([-1, 0, 1], [-1, 0, 1])]  # 9 actions

# ----- module configuration (mirrors BootstrappedDQN(__init__) shapes) -----
LAYERS = [16, 32, 32, 16, len(ACTIONS)]   # full chain of widths
HEADS = 3
HEAD_LENGTH = 2
SELECTED_HEAD = 0                          # deterministic stand-in for useRandomHead()
BATCH = 2

LANE = 128                                 # TPU lane width
SUB = 16                                   # bf16 sublane packing -> batch granularity


def _round_up(n, m):
    return ((n + m - 1) // m) * m


def _build_params(key):
    """Deterministically init all shared layers + all heads (PyTorch-style uniform)."""
    shared, heads = [], []
    n_shared = len(LAYERS) - HEAD_LENGTH
    for i in range(n_shared):
        fan_in, fan_out = LAYERS[i], LAYERS[i + 1]
        key, kw, kb = jax.random.split(key, 3)
        bound = 1.0 / jnp.sqrt(fan_in)
        w = jax.random.uniform(kw, (fan_in, fan_out), jnp.float32, -bound, bound)
        b = jax.random.uniform(kb, (1, fan_out), jnp.float32, -bound, bound)
        shared.append((w, b))
    head_idx = len(LAYERS) - HEAD_LENGTH
    for _ in range(HEADS):
        head = []
        for i in range(head_idx, len(LAYERS) - 1):
            fan_in, fan_out = LAYERS[i], LAYERS[i + 1]
            key, kw, kb = jax.random.split(key, 3)
            bound = 1.0 / jnp.sqrt(fan_in)
            w = jax.random.uniform(kw, (fan_in, fan_out), jnp.float32, -bound, bound)
            b = jax.random.uniform(kb, (1, fan_out), jnp.float32, -bound, bound)
            head.append((w, b))
        heads.append(head)
    return shared, heads


def _pack_weights(shared, heads):
    """Pack all layers into one [n_layers, 128, 128] bf16 slab.

    Layer i slab: weight at [:fan_in, :fan_out], bias at row 127, and
    [127,127] = 1.0 (the ones-carrier).  For layers >= 1 the bias is picked up
    by the carrier column of the activations; for layer 0 the kernel adds the
    row-127 bias vector explicitly (which also injects the carrier).  The last
    slab layer stacks ALL heads side by side along the output columns.
    """
    assert all(len(h) == 1 for h in heads), "head stacking assumes head_length == 2"
    n_act = len(ACTIONS)
    assert HEADS * n_act <= LANE - 1, "heads must fit left of the ones-carrier column"

    n_layers = len(shared) + 1
    slab = jnp.zeros((n_layers, LANE, LANE), jnp.float32)
    for i, (w, b) in enumerate(shared):
        fi, fo = w.shape
        slab = slab.at[i, :fi, :fo].set(w)
        slab = slab.at[i, LANE - 1, :fo].set(b.reshape(-1))
        slab = slab.at[i, LANE - 1, LANE - 1].set(1.0)
    li = n_layers - 1
    for h, head in enumerate(heads):
        (w, b), = head
        fi, fo = w.shape
        slab = slab.at[li, :fi, h * fo:(h + 1) * fo].set(w)
        slab = slab.at[li, LANE - 1, h * fo:(h + 1) * fo].set(b.reshape(-1))
    slab = slab.at[li, LANE - 1, LANE - 1].set(1.0)
    return slab.astype(jnp.bfloat16)


def _fused_mlp_kernel(n_layers, feat, x_ref, w_ref, out_ref):
    """Fused MLP: layer 0 = matmul + explicit bias row (injects ones-carrier);
    layers 1..n-1 = pure matmul + ReLU with bias folded via the carrier."""
    w0 = w_ref[0]                                     # [128, 128] bf16
    h = jnp.dot(x_ref[...], w0[:feat, :],
                preferred_element_type=jnp.float32)   # [tb, 128] f32
    h = jnp.maximum(h + w0[LANE - 1:LANE, :].astype(jnp.float32), 0.0)
    for i in range(1, n_layers):
        h = jnp.maximum(
            jnp.dot(h.astype(jnp.bfloat16), w_ref[i],
                    preferred_element_type=jnp.float32), 0.0)
    out_ref[...] = h.astype(out_ref.dtype)


def bootstrapped_dqn_forward_all_heads(x, packed_w, *, block_batch=2048):
    """Forward pass for ALL heads at once.

    Returns a lane-dense [batch_pad, 128] bf16 slab: columns [h*9, (h+1)*9)
    hold head h's Q-values; column 127 carries the constant 1 (bias folding).
    Padded rows contain bias-propagated garbage; slice [:batch] before use.
    """
    n_layers = packed_w.shape[0]
    batch, feat = x.shape

    b_min = _round_up(max(batch, SUB), SUB)
    # Cap the tile at ~ceil(batch/2) so there are >=2 grid steps whenever the
    # batch allows it (v7x megacore), and at block_batch to amortize per-step
    # overhead without growing VMEM needlessly.
    tb = max(SUB, min(block_batch, _round_up(pl.cdiv(b_min, 2), SUB)))
    pad_b = _round_up(b_min, tb)

    xb = x.astype(jnp.bfloat16)
    if pad_b != batch:
        xb = jnp.pad(xb, ((0, pad_b - batch), (0, 0)))

    kernel = functools.partial(_fused_mlp_kernel, n_layers, feat)
    return pl.pallas_call(
        kernel,
        out_shape=jax.ShapeDtypeStruct((pad_b, LANE), jnp.bfloat16),
        grid=(pad_b // tb,),
        in_specs=[
            pl.BlockSpec((tb, feat), lambda i: (i, 0)),              # un-padded input
            pl.BlockSpec((n_layers, LANE, LANE), lambda i: (0, 0, 0)),  # constant slab
        ],
        out_specs=pl.BlockSpec((tb, LANE), lambda i: (i, 0)),
        compiler_params=pltpu.CompilerParams(
            dimension_semantics=("parallel",)),
    )(xb, packed_w)


def _reference_forward(x, shared, head):
    h = x.astype(jnp.float32)
    for (w, b) in shared + head:
        h = jnp.maximum(h @ w + b, 0.0)
    return h


def _check(x, slab, shared, heads, atol=5e-2):
    batch = x.shape[0]
    n_act = len(ACTIONS)
    q_all = jax.block_until_ready(bootstrapped_dqn_forward_all_heads(x, slab))
    q_sel = q_all[:batch, SELECTED_HEAD * n_act:(SELECTED_HEAD + 1) * n_act]
    q_sel = q_sel.astype(jnp.float32)
    ref = _reference_forward(x, shared, heads[SELECTED_HEAD])
    assert q_sel.shape == (batch, n_act)
    # bf16 weights/activations vs f32 reference -> relaxed tolerance.
    assert jnp.allclose(q_sel, ref, atol=atol, rtol=atol), (
        float(jnp.max(jnp.abs(q_sel - ref))))


if __name__ == "__main__":
    key = jax.random.PRNGKey(0)
    key, kx, kx2 = jax.random.split(key, 3)

    shared, heads = _build_params(key)
    slab = _pack_weights(shared, heads)

    # Small-shape check (matches the module's usual per-observation call).
    x_small = jax.random.normal(kx, (BATCH, LAYERS[0]), jnp.float32)
    _check(x_small, slab, shared, heads)

    # Multi-tile check: non-tile-aligned batch exercising >=2 grid steps.
    x_big = jax.random.normal(kx2, (3000, LAYERS[0]), jnp.float32)
    _check(x_big, slab, shared, heads)

    print("KERNEL_OK")
</pallas_src>

<mosaic_0001>
module attributes {stable_mosaic.version = 11 : i64} {
  func.func @_fused_mlp_kernel(%arg0: i32, %arg1: memref<16x16xbf16, #tpu.memory_space<vmem>>, %arg2: memref<4x128x128xbf16, #tpu.memory_space<vmem>>, %arg3: memref<16x128xbf16, #tpu.memory_space<vmem>>) attributes {dimension_semantics = [#tpu.dimension_semantics<parallel>], iteration_bounds = array<i64: 1>, scalar_prefetch = 0 : i64, scratch_operands = 0 : i64, tpu.core_type = #tpu.core_type<tc>, window_params = [{transform_indices = @transform_0, window_bounds = array<i64: 16, 16>}, {pipeline_mode = #tpu.pipeline_mode<synchronous>, transform_indices = @transform_1, window_bounds = array<i64: 4, 128, 128>}, {transform_indices = @transform_2, window_bounds = array<i64: 16, 128>}]} {
    %c0 = arith.constant 0 : index
    %c0_0 = arith.constant 0 : index
    %c0_1 = arith.constant 0 : index
    %0 = vector.load %arg2[%c0, %c0_0, %c0_1] : memref<4x128x128xbf16, #tpu.memory_space<vmem>>, vector<1x128x128xbf16>
    %1 = vector.shape_cast %0 : vector<1x128x128xbf16> to vector<128x128xbf16>
    %c0_2 = arith.constant 0 : index
    %c0_3 = arith.constant 0 : index
    %2 = vector.load %arg1[%c0_2, %c0_3] : memref<16x16xbf16, #tpu.memory_space<vmem>>, vector<16x16xbf16>
    %3 = vector.extract_strided_slice %1 {offsets = [0, 0], sizes = [16, 128], strides = [1, 1]} : vector<128x128xbf16> to vector<16x128xbf16>
    %cst = arith.constant dense<0.000000e+00> : vector<16x128xf32>
    %4 = tpu.matmul %2, %3, %cst {dimension_numbers = #tpu.dot_dimension_numbers<[1], [0], [0], [1], [0, 0, 1, 1], [], []>} : vector<16x16xbf16>, vector<16x128xbf16>, vector<16x128xf32> -> vector<16x128xf32>
    %5 = vector.extract_strided_slice %1 {offsets = [127, 0], sizes = [1, 128], strides = [1, 1]} : vector<128x128xbf16> to vector<1x128xbf16>
    %6 = arith.extf %5 : vector<1x128xbf16> to vector<1x128xf32>
    %7 = vector.broadcast %6 : vector<1x128xf32> to vector<16x128xf32>
    %8 = arith.addf %4, %7 : vector<16x128xf32>
    %cst_4 = arith.constant 0.000000e+00 : f32
    %9 = vector.broadcast %cst_4 : f32 to vector<16x128xf32>
    %10 = arith.maximumf %8, %9 : vector<16x128xf32>
    %11 = arith.truncf %10 : vector<16x128xf32> to vector<16x128xbf16>
    %c1 = arith.constant 1 : index
    %c0_5 = arith.constant 0 : index
    %c0_6 = arith.constant 0 : index
    %12 = vector.load %arg2[%c1, %c0_5, %c0_6] : memref<4x128x128xbf16, #tpu.memory_space<vmem>>, vector<1x128x128xbf16>
    %13 = vector.shape_cast %12 : vector<1x128x128xbf16> to vector<128x128xbf16>
    %cst_7 = arith.constant dense<0.000000e+00> : vector<16x128xf32>
    %14 = tpu.matmul %11, %13, %cst_7 {dimension_numbers = #tpu.dot_dimension_numbers<[1], [0], [0], [1], [0, 0, 1, 1], [], []>} : vector<16x128xbf16>, vector<128x128xbf16>, vector<16x128xf32> -> vector<16x128xf32>
    %cst_8 = arith.constant 0.000000e+00 : f32
    %15 = vector.broadcast %cst_8 : f32 to vector<16x128xf32>
    %16 = arith.maximumf %14, %15 : vector<16x128xf32>
    %17 = arith.truncf %16 : vector<16x128xf32> to vector<16x128xbf16>
    %c2 = arith.constant 2 : index
    %c0_9 = arith.constant 0 : index
    %c0_10 = arith.constant 0 : index
    %18 = vector.load %arg2[%c2, %c0_9, %c0_10] : memref<4x128x128xbf16, #tpu.memory_space<vmem>>, vector<1x128x128xbf16>
    %19 = vector.shape_cast %18 : vector<1x128x128xbf16> to vector<128x128xbf16>
    %cst_11 = arith.constant dense<0.000000e+00> : vector<16x128xf32>
    %20 = tpu.matmul %17, %19, %cst_11 {dimension_numbers = #tpu.dot_dimension_numbers<[1], [0], [0], [1], [0, 0, 1, 1], [], []>} : vector<16x128xbf16>, vector<128x128xbf16>, vector<16x128xf32> -> vector<16x128xf32>
    %cst_12 = arith.constant 0.000000e+00 : f32
    %21 = vector.broadcast %cst_12 : f32 to vector<16x128xf32>
    %22 = arith.maximumf %20, %21 : vector<16x128xf32>
    %23 = arith.truncf %22 : vector<16x128xf32> to vector<16x128xbf16>
    %c3 = arith.constant 3 : index
    %c0_13 = arith.constant 0 : index
    %c0_14 = arith.constant 0 : index
    %24 = vector.load %arg2[%c3, %c0_13, %c0_14] : memref<4x128x128xbf16, #tpu.memory_space<vmem>>, vector<1x128x128xbf16>
    %25 = vector.shape_cast %24 : vector<1x128x128xbf16> to vector<128x128xbf16>
    %cst_15 = arith.constant dense<0.000000e+00> : vector<16x128xf32>
    %26 = tpu.matmul %23, %25, %cst_15 {dimension_numbers = #tpu.dot_dimension_numbers<[1], [0], [0], [1], [0, 0, 1, 1], [], []>} : vector<16x128xbf16>, vector<128x128xbf16>, vector<16x128xf32> -> vector<16x128xf32>
    %cst_16 = arith.constant 0.000000e+00 : f32
    %27 = vector.broadcast %cst_16 : f32 to vector<16x128xf32>
    %28 = arith.maximumf %26, %27 : vector<16x128xf32>
    %29 = arith.truncf %28 : vector<16x128xf32> to vector<16x128xbf16>
    %c0_17 = arith.constant 0 : index
    %c0_18 = arith.constant 0 : index
    %30 = vector.load %arg3[%c0_17, %c0_18] : memref<16x128xbf16, #tpu.memory_space<vmem>>, vector<16x128xbf16>
    tpu.vector_store %arg3[%c0_17, %c0_18], %29 {strides = array<i32>} : memref<16x128xbf16, #tpu.memory_space<vmem>>, vector<16x128xbf16>,
    return
  }
  func.func @transform_0(%arg0: i32) -> (i32, i32) {
    %c0_i32 = arith.constant 0 : i32
    %c0_i32_0 = arith.constant 0 : i32
    return %arg0, %c0_i32 : i32, i32
  }
  func.func @transform_1(%arg0: i32) -> (i32, i32, i32) {
    %c0_i32 = arith.constant 0 : i32
    %c0_i32_0 = arith.constant 0 : i32
    %c0_i32_1 = arith.constant 0 : i32
    %c0_i32_2 = arith.constant 0 : i32
    return %c0_i32, %c0_i32_0, %c0_i32_1 : i32, i32, i32
  }
  func.func @transform_2(%arg0: i32) -> (i32, i32) {
    %c0_i32 = arith.constant 0 : i32
    %c0_i32_0 = arith.constant 0 : i32
    return %arg0, %c0_i32 : i32, i32
  }
}

</mosaic_0001>

<llo_original>
// kernel: tpu_custom_call.1
$region0: #{tpu_custom_call.1}
  #allocation0 [shape = 'u32[]', space=smem, size = 0x4, offset = 0x4, fixed_abs, tag = 'smem constant byte address 0x4 - core index']
  #allocation1 [shape = 'u32[144,128]{1,0:T(1,128)}', space=vmem, size = 0x12000, scoped, tag = 'internal scratch']
  %s0 = inlined_call_operand.hbm [shape: bf16[16,16], index: 0, kind: input, shape index: {}]
  %s1 = inlined_call_operand.hbm [shape: bf16[4,128,128], index: 1, kind: input, shape index: {}]
  %s2 = inlined_call_operand.hbm [shape: bf16[16,128], index: 2, kind: output, shape index: {}]
  %s3 = sld [smem:[#allocation0]]
  $region26: #{tpu_custom_call.1} parent=0
    _
  %s5 = ssub.s32 1, %s3
  %s6 = scalar_select 0, %s5, %s3
  $region1: #{tpu_custom_call.1} parent=0
    #allocation2 [shape = 'u8[4096]{0}', space=vmem, size = 0x1000, scoped, tag = 'input window, operand 0, single buffered']
    #allocation3 [shape = 's32[1]{0}', space=sflag, size = 0x4, scoped, tag = 'scoped memory for tpu_custom_call.1']
    #allocation4 [shape = 's32[1]{0}', space=sflag, size = 0x4, scoped, tag = 'scoped memory for tpu_custom_call.1']
    #allocation5 [shape = 'u8[131072]{0}', space=vmem, size = 0x20000, scoped, tag = 'input window, operand 1, single buffered']
    #allocation6 [shape = 's32[1]{0}', space=sflag, size = 0x4, scoped, tag = 'scoped memory for tpu_custom_call.1']
    #allocation7 [shape = 'u8[4096]{0}', space=vmem, size = 0x1000, scoped, tag = 'output window, operand 0, single buffered']
    %7 = vsyncpa [#allocation3], 0
    %8 = vsyncpa [#allocation6], 0
    %9 = vsyncpa [#allocation4], 0
    // Predicated region
    $region2: #{tpu_custom_call.1} parent=1 // pred_check
      _
    $region3: #{tpu_custom_call.1} parent=1 // pred_check_branch
      %11 = sbr.rel (0) target = $region5
    $region4: #{tpu_custom_call.1} parent=1 // pred_region
      %s13 = ssub.s32 128, 128
      %14 = vsyncadd [#allocation3], %s13
      %s15 = sshll.u32 [#allocation2], 4
      %s16 = int_to_ptr.vmem [resolvable:$true] %s15
      %21 = dma.hbm_to_vmem [thread:$0]  %s0, 128, %s16, [#allocation3], 64, 64, 4
    $region5: #{tpu_custom_call.1} parent=1 // pred_fallthru
      _
    // Predicated region
    $region6: #{tpu_custom_call.1} parent=1 // pred_check
      _
    $region7: #{tpu_custom_call.1} parent=1 // pred_check_branch
      %23 = sbr.rel (0) target = $region9
    $region8: #{tpu_custom_call.1} parent=1 // pred_region
      %s25 = ssub.s32 4096, 4096
      %26 = vsyncadd [#allocation6], %s25
      %s27 = sshll.u32 [#allocation5], 4
      %s28 = int_to_ptr.vmem [resolvable:$true] %s27
      %33 = dma.hbm_to_vmem [thread:$0]  %s1, 4096, %s28, [#allocation6], 64, 64, 4
    $region9: #{tpu_custom_call.1} parent=1 // pred_fallthru
      _
    // Predicated region
    $region10: #{tpu_custom_call.1} parent=1 // pred_check
      _
    $region11: #{tpu_custom_call.1} parent=1 // pred_check_branch
      %35 = sbr.rel (0) target = $region13
    $region12: #{tpu_custom_call.1} parent=1 // pred_region
      %36 = dma.done [#allocation3], 128
    $region13: #{tpu_custom_call.1} parent=1 // pred_fallthru
      _
    // Predicated region
    $region14: #{tpu_custom_call.1} parent=1 // pred_check
      _
    $region15: #{tpu_custom_call.1} parent=1 // pred_check_branch
      %38 = sbr.rel (0) target = $region17
    $region16: #{tpu_custom_call.1} parent=1 // pred_region
      %39 = dma.done [#allocation6], 4096
    $region17: #{tpu_custom_call.1} parent=1 // pred_fallthru
      _
    %v41 = vld [vmem:[#allocation5] sm:$0xf]
    %v42 = vld [vmem:[#allocation5 + $0x4] sm:$0xf]
    %v43 = vld [vmem:[#allocation5 + $0x3c] sm:$0xf]
    %v44 = vld [vmem:[#allocation2] sm:$0xf]
    %v45 = vld [vmem:[#allocation2 + $0x4] sm:$0xf]
    %v46 = vunpack.c.l.bf16 %v43
    %v47 = vlaneseq
    %v48 = vshrl.u32 %v47, 7
    %v49 = vsub.s32 7, %v48
    %v50 = vrot.slane %v46, %v49
    %v53 = vunpack.c.l.b16 %v44
    %v54 = vunpack.c.l.b16 %v45
    %v55 = vpack.c.b16 %v54, %v53
    %v58 = vunpack.c.l.b16 %v41
    %v59 = vunpack.c.l.b16 %v42
    %v60 = vpack.c.b16 %v59, %v58
    %vm62 = vcmask 130048
    %v64 = vsel %vm62, %v55, 0
    %66 = vmatprep.subr.bf16.mxu0 0
    %67 = vmatpush1.bf16.msra.mxu0 %v60
    %68 = vmatprep.subr.bf16.mxu0 0
    %69 = vmatpush1.bf16.msra.mxu0 0
    %70 = vmatprep.subr.bf16.mxu0 0
    %71 = vmatpush1.bf16.msra.mxu0 0
    %72 = vmatprep.subr.bf16.mxu0 0
    %73 = vmatpush1.bf16.msra.mxu0 0
    %74 = vmatprep.subr.bf16.mxu0 0
    %75 = vmatpush1.bf16.msra.mxu0 0
    %76 = vmatprep.subr.bf16.mxu0 0
    %77 = vmatpush1.bf16.msra.mxu0 0
    %78 = vmatprep.subr.bf16.mxu0 0
    %79 = vmatpush1.bf16.msra.mxu0 0
    %80 = vmatprep.subr.bf16.mxu0 0
    %81 = vmatpush1.bf16.msra.mxu0 0
    %82 = vmatprep.subr.bf16.mxu0 0
    %83 = vmatpush1.bf16.msra.mxu0 0
    %84 = vmatprep.subr.bf16.mxu0 0
    %85 = vmatpush1.bf16.msra.mxu0 0
    %86 = vmatprep.subr.bf16.mxu0 0
    %87 = vmatpush1.bf16.msra.mxu0 0
    %88 = vmatprep.subr.bf16.mxu0 0
    %89 = vmatpush1.bf16.msra.mxu0 0
    %90 = vmatprep.subr.bf16.mxu0 0
    %91 = vmatpush1.bf16.msra.mxu0 0
    %92 = vmatprep.subr.bf16.mxu0 0
    %93 = vmatpush1.bf16.msra.mxu0 0
    %94 = vmatprep.subr.bf16.mxu0 0
    %95 = vmatpush1.bf16.msra.mxu0 0
    %96 = vmatprep.subr.bf16.mxu0 0
    %97 = vmatpush1.bf16.msra.mxu0 0
    %98 = vmatprep.mubr.bf16.mxu0 0
    %99 = vmatmul.mubr.bf16.gmra.mrb[0].mxu0 %v64
    %v100 = vpop.f32.mrb[0].mxu0
    %v101 = vadd.f32 %v50, %v100
    %v102 = vpop.f32.mrb[0].mxu0
    %v103 = vpop.f32.mrb[0].mxu0
    %v104 = vadd.f32 %v50, %v103
    %v105 = vpop.f32.mrb[0].mxu0
    %106 = vdwg.mxu0
    %v107 = vmax.f32 %v101, 0.0
    %v108 = vmax.f32 %v104, 0.0
    %v109 = vpack.c.bf16 %v108, %v107
    %s110 = scalar_lea.vmem [#allocation5], 64
    %v111 = vld [vmem:[%s110] sm:$0xf]
    %v112 = vld [vmem:[%s110 + $0x4] sm:$0xf]
    %v113 = vld [vmem:[%s110 + $0x8] sm:$0xf]
    %v114 = vld [vmem:[%s110 + $0xc] sm:$0xf]
    %v115 = vld [vmem:[%s110 + $0x10] sm:$0xf]
    %v116 = vld [vmem:[%s110 + $0x14] sm:$0xf]
    %v117 = vld [vmem:[%s110 + $0x18] sm:$0xf]
    %v118 = vld [vmem:[%s110 + $0x1c] sm:$0xf]
    %v119 = vld [vmem:[%s110 + $0x20] sm:$0xf]
    %v120 = vld [vmem:[%s110 + $0x24] sm:$0xf]
    %v121 = vld [vmem:[%s110 + $0x28] sm:$0xf]
    %v122 = vld [vmem:[%s110 + $0x2c] sm:$0xf]
    %v123 = vld [vmem:[%s110 + $0x30] sm:$0xf]
    %v124 = vld [vmem:[%s110 + $0x34] sm:$0xf]
    %v125 = vld [vmem:[%s110 + $0x38] sm:$0xf]
    %v126 = vld [vmem:[%s110 + $0x3c] sm:$0xf]
    %v143 = vunpack.c.l.b16 %v111
    %v144 = vunpack.c.l.b16 %v112
    %v145 = vunpack.c.l.b16 %v113
    %v146 = vunpack.c.l.b16 %v114
    %v147 = vunpack.c.l.b16 %v115
    %v148 = vunpack.c.l.b16 %v116
    %v149 = vunpack.c.l.b16 %v117
    %v150 = vunpack.c.l.b16 %v118
    %v151 = vunpack.c.l.b16 %v119
    %v152 = vunpack.c.l.b16 %v120
    %v153 = vunpack.c.l.b16 %v121
    %v154 = vunpack.c.l.b16 %v122
    %v155 = vunpack.c.l.b16 %v123
    %v156 = vunpack.c.l.b16 %v124
    %v157 = vunpack.c.l.b16 %v125
    %v158 = vunpack.c.l.b16 %v126
    %v159 = vpack.c.b16 %v144, %v143
    %v160 = vpack.c.b16 %v146, %v145
    %v161 = vpack.c.b16 %v148, %v147
    %v162 = vpack.c.b16 %v150, %v149
    %v163 = vpack.c.b16 %v152, %v151
    %v164 = vpack.c.b16 %v154, %v153
    %v165 = vpack.c.b16 %v156, %v155
    %v166 = vpack.c.b16 %v158, %v157
    %175 = vmatprep.subr.bf16.mxu0 0
    %176 = vmatpush1.bf16.msra.mxu0 %v159
    %177 = vmatprep.subr.bf16.mxu0 0
    %178 = vmatpush1.bf16.msra.mxu0 %v160
    %179 = vmatprep.subr.bf16.mxu0 0
    %180 = vmatpush1.bf16.msra.mxu0 %v161
    %181 = vmatprep.subr.bf16.mxu0 0
    %182 = vmatpush1.bf16.msra.mxu0 %v162
    %183 = vmatprep.subr.bf16.mxu0 0
    %184 = vmatpush1.bf16.msra.mxu0 %v163
    %185 = vmatprep.subr.bf16.mxu0 0
    %186 = vmatpush1.bf16.msra.mxu0 %v164
    %187 = vmatprep.subr.bf16.mxu0 0
    %188 = vmatpush1.bf16.msra.mxu0 %v165
    %189 = vmatprep.subr.bf16.mxu0 0
    %190 = vmatpush1.bf16.msra.mxu0 %v166
    %191 = vmatprep.subr.bf16.mxu0 0
    %192 = vmatpush1.bf16.msra.mxu0 0
    %193 = vmatprep.subr.bf16.mxu0 0
    %194 = vmatpush1.bf16.msra.mxu0 0
    %195 = vmatprep.subr.bf16.mxu0 0
    %196 = vmatpush1.bf16.msra.mxu0 0
    %197 = vmatprep.subr.bf16.mxu0 0
    %198 = vmatpush1.bf16.msra.mxu0 0
    %199 = vmatprep.subr.bf16.mxu0 0
    %200 = vmatpush1.bf16.msra.mxu0 0
    %201 = vmatprep.subr.bf16.mxu0 0
    %202 = vmatpush1.bf16.msra.mxu0 0
    %203 = vmatprep.subr.bf16.mxu0 0
    %204 = vmatpush1.bf16.msra.mxu0 0
    %205 = vmatprep.subr.bf16.mxu0 0
    %206 = vmatpush1.bf16.msra.mxu0 0
    %207 = vmatprep.mubr.bf16.mxu0 0
    %208 = vmatmul.mubr.bf16.gmra.mrb[0].mxu0 %v109
    %v209 = vpop.f32.mrb[0].mxu0
    %v210 = vadd.f32 0.0, %v209
    %v211 = vpop.f32.mrb[0].mxu0
    %v212 = vpop.f32.mrb[0].mxu0
    %v213 = vadd.f32 0.0, %v212
    %v214 = vpop.f32.mrb[0].mxu0
    %215 = vdwg.mxu0
    %v216 = vmax.f32 %v210, 0.0
    %v217 = vmax.f32 %v213, 0.0
    %v218 = vpack.c.bf16 %v217, %v216
    %s219 = scalar_lea.vmem [#allocation5], 128
    %v220 = vld [vmem:[%s219] sm:$0xf]
    %v221 = vld [vmem:[%s219 + $0x4] sm:$0xf]
    %v222 = vld [vmem:[%s219 + $0x8] sm:$0xf]
    %v223 = vld [vmem:[%s219 + $0xc] sm:$0xf]
    %v224 = vld [vmem:[%s219 + $0x10] sm:$0xf]
    %v225 = vld [vmem:[%s219 + $0x14] sm:$0xf]
    %v226 = vld [vmem:[%s219 + $0x18] sm:$0xf]
    %v227 = vld [vmem:[%s219 + $0x1c] sm:$0xf]
    %v228 = vld [vmem:[%s219 + $0x20] sm:$0xf]
    %v229 = vld [vmem:[%s219 + $0x24] sm:$0xf]
    %v230 = vld [vmem:[%s219 + $0x28] sm:$0xf]
    %v231 = vld [vmem:[%s219 + $0x2c] sm:$0xf]
    %v232 = vld [vmem:[%s219 + $0x30] sm:$0xf]
    %v233 = vld [vmem:[%s219 + $0x34] sm:$0xf]
    %v234 = vld [vmem:[%s219 + $0x38] sm:$0xf]
    %v235 = vld [vmem:[%s219 + $0x3c] sm:$0xf]
    %v252 = vunpack.c.l.b16 %v220
    %v253 = vunpack.c.l.b16 %v221
    %v254 = vunpack.c.l.b16 %v222
    %v255 = vunpack.c.l.b16 %v223
    %v256 = vunpack.c.l.b16 %v224
    %v257 = vunpack.c.l.b16 %v225
    %v258 = vunpack.c.l.b16 %v226
    %v259 = vunpack.c.l.b16 %v227
    %v260 = vunpack.c.l.b16 %v228
    %v261 = vunpack.c.l.b16 %v229
    %v262 = vunpack.c.l.b16 %v230
    %v263 = vunpack.c.l.b16 %v231
    %v264 = vunpack.c.l.b16 %v232
    %v265 = vunpack.c.l.b16 %v233
    %v266 = vunpack.c.l.b16 %v234
    %v267 = vunpack.c.l.b16 %v235
    %v268 = vpack.c.b16 %v253, %v252
    %v269 = vpack.c.b16 %v255, %v254
    %v270 = vpack.c.b16 %v257, %v256
    %v271 = vpack.c.b16 %v259, %v258
    %v272 = vpack.c.b16 %v261, %v260
    %v273 = vpack.c.b16 %v263, %v262
    %v274 = vpack.c.b16 %v265, %v264
    %v275 = vpack.c.b16 %v267, %v266
    %284 = vmatprep.subr.bf16.mxu0 0
    %285 = vmatpush1.bf16.msra.mxu0 %v268
    %286 = vmatprep.subr.bf16.mxu0 0
    %287 = vmatpush1.bf16.msra.mxu0 %v269
    %288 = vmatprep.subr.bf16.mxu0 0
    %289 = vmatpush1.bf16.msra.mxu0 %v270
    %290 = vmatprep.subr.bf16.mxu0 0
    %291 = vmatpush1.bf16.msra.mxu0 %v271
    %292 = vmatprep.subr.bf16.mxu0 0
    %293 = vmatpush1.bf16.msra.mxu0 %v272
    %294 = vmatprep.subr.bf16.mxu0 0
    %295 = vmatpush1.bf16.msra.mxu0 %v273
    %296 = vmatprep.subr.bf16.mxu0 0
    %297 = vmatpush1.bf16.msra.mxu0 %v274
    %298 = vmatprep.subr.bf16.mxu0 0
    %299 = vmatpush1.bf16.msra.mxu0 %v275
    %300 = vmatprep.subr.bf16.mxu0 0
    %301 = vmatpush1.bf16.msra.mxu0 0
    %302 = vmatprep.subr.bf16.mxu0 0
    %303 = vmatpush1.bf16.msra.mxu0 0
    %304 = vmatprep.subr.bf16.mxu0 0
    %305 = vmatpush1.bf16.msra.mxu0 0
    %306 = vmatprep.subr.bf16.mxu0 0
    %307 = vmatpush1.bf16.msra.mxu0 0
    %308 = vmatprep.subr.bf16.mxu0 0
    %309 = vmatpush1.bf16.msra.mxu0 0
    %310 = vmatprep.subr.bf16.mxu0 0
    %311 = vmatpush1.bf16.msra.mxu0 0
    %312 = vmatprep.subr.bf16.mxu0 0
    %313 = vmatpush1.bf16.msra.mxu0 0
    %314 = vmatprep.subr.bf16.mxu0 0
    %315 = vmatpush1.bf16.msra.mxu0 0
    %316 = vmatprep.mubr.bf16.mxu0 0
    %317 = vmatmul.mubr.bf16.gmra.mrb[0].mxu0 %v218
    %v318 = vpop.f32.mrb[0].mxu0
    %v319 = vadd.f32 0.0, %v318
    %v320 = vpop.f32.mrb[0].mxu0
    %v321 = vpop.f32.mrb[0].mxu0
    %v322 = vadd.f32 0.0, %v321
    %v323 = vpop.f32.mrb[0].mxu0
    %324 = vdwg.mxu0
    %v325 = vmax.f32 %v319, 0.0
    %v326 = vmax.f32 %v322, 0.0
    %v327 = vpack.c.bf16 %v326, %v325
    %s328 = scalar_lea.vmem [#allocation5], 192
    %v329 = vld [vmem:[%s328] sm:$0xf]
    %v330 = vld [vmem:[%s328 + $0x4] sm:$0xf]
    %v331 = vld [vmem:[%s328 + $0x8] sm:$0xf]
    %v332 = vld [vmem:[%s328 + $0xc] sm:$0xf]
    %v333 = vld [vmem:[%s328 + $0x10] sm:$0xf]
    %v334 = vld [vmem:[%s328 + $0x14] sm:$0xf]
    %v335 = vld [vmem:[%s328 + $0x18] sm:$0xf]
    %v336 = vld [vmem:[%s328 + $0x1c] sm:$0xf]
    %v337 = vld [vmem:[%s328 + $0x20] sm:$0xf]
    %v338 = vld [vmem:[%s328 + $0x24] sm:$0xf]
    %v339 = vld [vmem:[%s328 + $0x28] sm:$0xf]
    %v340 = vld [vmem:[%s328 + $0x2c] sm:$0xf]
    %v341 = vld [vmem:[%s328 + $0x30] sm:$0xf]
    %v342 = vld [vmem:[%s328 + $0x34] sm:$0xf]
    %v343 = vld [vmem:[%s328 + $0x38] sm:$0xf]
    %v344 = vld [vmem:[%s328 + $0x3c] sm:$0xf]
    %v361 = vunpack.c.l.b16 %v329
    %v362 = vunpack.c.l.b16 %v330
    %v363 = vunpack.c.l.b16 %v331
    %v364 = vunpack.c.l.b16 %v332
    %v365 = vunpack.c.l.b16 %v333
    %v366 = vunpack.c.l.b16 %v334
    %v367 = vunpack.c.l.b16 %v335
    %v368 = vunpack.c.l.b16 %v336
    %v369 = vunpack.c.l.b16 %v337
    %v370 = vunpack.c.l.b16 %v338
    %v371 = vunpack.c.l.b16 %v339
    %v372 = vunpack.c.l.b16 %v340
    %v373 = vunpack.c.l.b16 %v341
    %v374 = vunpack.c.l.b16 %v342
    %v375 = vunpack.c.l.b16 %v343
    %v376 = vunpack.c.l.b16 %v344
    %v377 = vpack.c.b16 %v362, %v361
    %v378 = vpack.c.b16 %v364, %v363
    %v379 = vpack.c.b16 %v366, %v365
    %v380 = vpack.c.b16 %v368, %v367
    %v381 = vpack.c.b16 %v370, %v369
    %v382 = vpack.c.b16 %v372, %v371
    %v383 = vpack.c.b16 %v374, %v373
    %v384 = vpack.c.b16 %v376, %v375
    %393 = vmatprep.subr.bf16.mxu0 0
    %394 = vmatpush1.bf16.msra.mxu0 %v377
    %395 = vmatprep.subr.bf16.mxu0 0
    %396 = vmatpush1.bf16.msra.mxu0 %v378
    %397 = vmatprep.subr.bf16.mxu0 0
    %398 = vmatpush1.bf16.msra.mxu0 %v379
    %399 = vmatprep.subr.bf16.mxu0 0
    %400 = vmatpush1.bf16.msra.mxu0 %v380
    %401 = vmatprep.subr.bf16.mxu0 0
    %402 = vmatpush1.bf16.msra.mxu0 %v381
    %403 = vmatprep.subr.bf16.mxu0 0
    %404 = vmatpush1.bf16.msra.mxu0 %v382
    %405 = vmatprep.subr.bf16.mxu0 0
    %406 = vmatpush1.bf16.msra.mxu0 %v383
    %407 = vmatprep.subr.bf16.mxu0 0
    %408 = vmatpush1.bf16.msra.mxu0 %v384
    %409 = vmatprep.subr.bf16.mxu0 0
    %410 = vmatpush1.bf16.msra.mxu0 0
    %411 = vmatprep.subr.bf16.mxu0 0
    %412 = vmatpush1.bf16.msra.mxu0 0
    %413 = vmatprep.subr.bf16.mxu0 0
    %414 = vmatpush1.bf16.msra.mxu0 0
    %415 = vmatprep.subr.bf16.mxu0 0
    %416 = vmatpush1.bf16.msra.mxu0 0
    %417 = vmatprep.subr.bf16.mxu0 0
    %418 = vmatpush1.bf16.msra.mxu0 0
    %419 = vmatprep.subr.bf16.mxu0 0
    %420 = vmatpush1.bf16.msra.mxu0 0
    %421 = vmatprep.subr.bf16.mxu0 0
    %422 = vmatpush1.bf16.msra.mxu0 0
    %423 = vmatprep.subr.bf16.mxu0 0
    %424 = vmatpush1.bf16.msra.mxu0 0
    %425 = vmatprep.mubr.bf16.mxu0 0
    %426 = vmatmul.mubr.bf16.gmra.mrb[0].mxu0 %v327
    %v427 = vpop.f32.mrb[0].mxu0
    %v428 = vadd.f32 0.0, %v427
    %v429 = vpop.f32.mrb[0].mxu0
    %v430 = vpop.f32.mrb[0].mxu0
    %v431 = vadd.f32 0.0, %v430
    %v432 = vpop.f32.mrb[0].mxu0
    %433 = vdwg.mxu0
    %v434 = vmax.f32 %v428, 0.0
    %v435 = vmax.f32 %v431, 0.0
    %v436 = vpack.c.bf16 %v435, %v434
    %v438 = vunpack.c.l.b16 %v436
    %v439 = vunpack.c.h.b16 %v436
    %v440 = vpack.c.b16 %v438, %v438
    %v441 = vpack.c.b16 %v439, %v439
    %444 = vst [vmem:[#allocation7] sm:$0xf] %v440
    %445 = vst [vmem:[#allocation7 + $0x4] sm:$0xf] %v441
    // Predicated region
    $region18: #{tpu_custom_call.1} parent=1 // pred_check
      _
    $region19: #{tpu_custom_call.1} parent=1 // pred_check_branch
      %447 = sbr.rel (0) target = $region21
    $region20: #{tpu_custom_call.1} parent=1 // pred_region
      %s449 = ssub.s32 128, 128
      %450 = vsyncadd [#allocation4], %s449
      %s451 = sshll.u32 [#allocation7], 4
      %s452 = int_to_ptr.vmem [resolvable:$true] %s451
      %457 = dma.vmem_to_hbm [thread:$0]  %s452, 128, %s2, [#allocation4], 64, 64, 4
    $region21: #{tpu_custom_call.1} parent=1 // pred_fallthru
      _
    // Predicated region
    $region22: #{tpu_custom_call.1} parent=1 // pred_check
      _
    $region23: #{tpu_custom_call.1} parent=1 // pred_check_branch
      %459 = sbr.rel (0) target = $region25
    $region24: #{tpu_custom_call.1} parent=1 // pred_region
      %460 = dma.done [#allocation4], 128
    $region25: #{tpu_custom_call.1} parent=1 // pred_fallthru
      _
    %461 = vsyncpa [#allocation3], 1
    %462 = vsyncpa [#allocation6], 1
    %463 = vsyncpa [#allocation4], 1

</llo_original>
